<compile_context>
chip_gen: v7x
topology: tpu7x:2x2x1
jax: 0.10.0
libtpu: 0.0.40
codegen_flags: <defaults>
</compile_context>

<pallas_src>
import functools

import numpy as np
import jax
import jax.numpy as jnp
from jax.experimental import pallas as pl
from jax.experimental.pallas import tpu as pltpu


def _roundup(a, b):
    return -(-a // b) * b


def _band_counts(L, kernel_size, stride, pad, l_out):
    """Tap-count band matrix: Acnt[t, j] = #{k : clip(t*stride + k - pad, 0, L-1) == j}.

    out[t] = (1/K) * sum_j Acnt[t, j] * x[j] reproduces the PyTorch module
    (front/end replicate padding + AvgPool1d(K, stride)).  Built with numpy at
    trace time; kernel_size / stride / shapes are all static.
    """
    A = np.zeros((l_out, L), dtype=np.float32)
    t = np.arange(l_out)[:, None]                   # [l_out, 1]
    k = np.arange(kernel_size)[None, :]             # [1, K]
    j = np.clip(t * stride + k - pad, 0, L - 1)     # [l_out, K]
    rows = np.broadcast_to(t, j.shape)
    np.add.at(A, (rows, j), np.float32(1.0))
    return A


def _padded_bytes(rows, cols, itemsize):
    """VMEM footprint of a (rows, cols) tile after (sublane, lane) padding."""
    sub = 8 * max(1, 4 // itemsize)   # f32 -> 8, bf16 -> 16, int8 -> 32
    return _roundup(max(rows, 1), sub) * _roundup(max(cols, 1), 128) * itemsize


def _vmem_budget():
    """(usable_vmem_bytes, target_input_block_bytes) for the current chip."""
    try:
        cap = pltpu.get_tpu_info().vmem_capacity_bytes
    except Exception:
        cap = 64 << 20   # conservative (v7x-sized) fallback
    usable = max(24 << 20, min(cap - (16 << 20), 96 << 20))   # v7x ~48M, v6e ~96M
    target_in = min(16 << 20, max(6 << 20, usable // 6))      # v7x ~8M, v6e ~16M
    return usable, target_in


def _choose_tiles(l_out, L, N, x_itemsize, a_itemsize):
    """Pick (t_out, n_tile) obeying the (8,128) block rules and the VMEM budget."""
    usable, target_in = _vmem_budget()

    def need(t_out, n_tile):
        a_blk = _padded_bytes(t_out, L, a_itemsize)
        x_blk = _padded_bytes(L, n_tile, x_itemsize)
        o_blk = _padded_bytes(t_out, n_tile, x_itemsize)
        # Conservative: every operand double-buffered, plus 2 MiB slack.
        return 2 * (a_blk + x_blk + o_blk) + (2 << 20)

    t_out, n_tile = l_out, N

    # 1) Keep the streamed x block near the per-generation target size
    #    (n_tile must stay a multiple of 128 once we tile it).
    while n_tile > 128 and _padded_bytes(L, n_tile, x_itemsize) > target_in:
        n_tile = _roundup(max(128, n_tile // 2), 128)

    # 2) Fit the padded pipeline footprint in VMEM: shrink tiles, never the limit.
    while need(t_out, n_tile) > usable:
        if t_out > 8:
            t_out = _roundup(max(8, t_out // 2), 8)
        elif n_tile > 128:
            n_tile = _roundup(max(128, n_tile // 2), 128)
        else:
            break   # minimal legal tiles; declare the true need below.
    # TODO(synk): for very long L the (L, n_tile) x block itself may not fit;
    # that needs band-aware tiling of the contraction/time dim (sliding x
    # window + per-tile band blocks), not implemented here.

    # 3) Keep >= 4 grid steps (>= 2 per v7x TensorCore) whenever legally splittable.
    def steps(t, n):
        return (-(-N // n)) * (-(-l_out // t))

    while steps(t_out, n_tile) < 4:
        if n_tile >= 256:
            n_tile = _roundup(n_tile // 2, 128)
        elif t_out >= 16:
            t_out = _roundup(t_out // 2, 8)
        else:
            break

    return t_out, n_tile, need(t_out, n_tile)


def _make_band_avg_kernel(inv_k):
    def kernel(a_ref, x_ref, o_ref):
        # a_ref: (t_out, L) tap counts; x_ref: (L, n_tile); o_ref: (t_out, n_tile)
        acc = jnp.dot(a_ref[...], x_ref[...], preferred_element_type=jnp.float32)
        o_ref[...] = (acc * inv_k).astype(o_ref.dtype)
    return kernel


@functools.partial(jax.jit, static_argnames=("kernel_size", "stride"))
def moving_avg(x, kernel_size: int, stride: int):
    """Pallas equivalent of the PyTorch `moving_avg.forward` for x of shape [B, L, C]."""
    B, L, C = x.shape
    pad = (kernel_size - 1) // 2
    l_out = (L + 2 * pad - kernel_size) // stride + 1
    assert l_out >= 1, "kernel_size too large for this sequence length"
    N = B * C

    # Band matrix of tap counts.  bf16 inputs keep the native bf16 MXU path
    # (integer counts <= K are exact in bf16 for K <= 256); otherwise f32.
    a_dtype = (jnp.bfloat16
               if (x.dtype == jnp.bfloat16 and kernel_size <= 256)
               else jnp.float32)
    A = jnp.asarray(_band_counts(L, kernel_size, stride, pad, l_out), dtype=a_dtype)

    # Lane-dense layout: (B, L, C) -> (L, B*C) so the fused batch*channel dim
    # sits on the MXU N dim and the lane dim.  Callers that already keep
    # activations time-major as (L, B*C) can skip these two copies entirely.
    x2d = jnp.transpose(x, (1, 0, 2)).reshape(L, N)

    x_item = jnp.dtype(x.dtype).itemsize
    a_item = jnp.dtype(a_dtype).itemsize
    t_out, n_tile, vmem_need = _choose_tiles(l_out, L, N, x_item, a_item)

    grid = (-(-N // n_tile), -(-l_out // t_out))   # (N tiles outer, time tiles inner)

    out2d = pl.pallas_call(
        _make_band_avg_kernel(float(1.0 / kernel_size)),
        out_shape=jax.ShapeDtypeStruct((l_out, N), x.dtype),
        grid=grid,
        in_specs=[
            # Band block: streams along the inner time axis; with a single time
            # tile its block index is constant, so the pipeline DMAs it once
            # and keeps it VMEM-resident.
            pl.BlockSpec((t_out, L), lambda j, i: (i, 0)),
            # x block: constant across the inner time axis -> fetched from HBM
            # exactly once per column tile.
            pl.BlockSpec((L, n_tile), lambda j, i: (0, j)),
        ],
        out_specs=pl.BlockSpec((t_out, n_tile), lambda j, i: (i, j)),
        compiler_params=pltpu.CompilerParams(
            dimension_semantics=("parallel", "parallel"),
            vmem_limit_bytes=int(max(vmem_need, 32 << 20)),
        ),
    )(A, x2d)

    return jnp.transpose(out2d.reshape(l_out, B, C), (1, 0, 2))


def _reference_moving_avg(x, kernel_size, stride):
    """Pure-JAX reference mirroring the PyTorch semantics (for verification)."""
    pad = (kernel_size - 1) // 2
    front = jnp.repeat(x[:, 0:1, :], pad, axis=1)
    end = jnp.repeat(x[:, -1:, :], pad, axis=1)
    xp = jnp.concatenate([front, x, end], axis=1)  # [B, L_pad, C]
    l_pad = xp.shape[1]
    l_out = (l_pad - kernel_size) // stride + 1
    idx = jnp.arange(l_out) * stride
    windows = jnp.stack(
        [xp[:, idx + k, :] for k in range(kernel_size)], axis=0
    )  # [K, B, L_out, C]
    return jnp.mean(windows.astype(jnp.float32), axis=0).astype(x.dtype)


if __name__ == "__main__":
    # Small, deterministic example consistent with a time-series input [B, L, C].
    B, L, C = 2, 16, 32
    key = jax.random.PRNGKey(0)
    x = jax.random.normal(key, (B, L, C), dtype=jnp.float32)

    # stride=1 (the Autoformer default path).
    out = jax.block_until_ready(moving_avg(x, kernel_size=5, stride=1))
    ref = _reference_moving_avg(x, 5, 1)
    assert out.shape == ref.shape, (out.shape, ref.shape)
    assert jnp.allclose(out, ref, atol=1e-5, rtol=1e-5), "stride=1 mismatch"

    # stride=2: handled by the band matrix, no strided sublane loads.
    out2 = jax.block_until_ready(moving_avg(x, kernel_size=5, stride=2))
    ref2 = _reference_moving_avg(x, 5, 2)
    assert out2.shape == ref2.shape, (out2.shape, ref2.shape)
    assert jnp.allclose(out2, ref2, atol=1e-5, rtol=1e-5), "stride=2 mismatch"

    print("KERNEL_OK")
</pallas_src>

<mosaic_0001>
module attributes {stable_mosaic.version = 11 : i64} {
  func.func @kernel(%arg0: i32, %arg1: i32, %arg2: memref<8x16xf32, #tpu.memory_space<vmem>>, %arg3: memref<16x64xf32, #tpu.memory_space<vmem>>, %arg4: memref<8x64xf32, #tpu.memory_space<vmem>>) attributes {dimension_semantics = [#tpu.dimension_semantics<parallel>, #tpu.dimension_semantics<parallel>], iteration_bounds = array<i64: 1, 2>, scalar_prefetch = 0 : i64, scratch_operands = 0 : i64, tpu.core_type = #tpu.core_type<tc>, window_params = [{transform_indices = @transform_0, window_bounds = array<i64: 8, 16>}, {transform_indices = @transform_1, window_bounds = array<i64: 16, 64>}, {transform_indices = @transform_2, window_bounds = array<i64: 8, 64>}]} {
    %c0 = arith.constant 0 : index
    %c0_0 = arith.constant 0 : index
    %0 = vector.load %arg2[%c0, %c0_0] : memref<8x16xf32, #tpu.memory_space<vmem>>, vector<8x16xf32>
    %c0_1 = arith.constant 0 : index
    %c0_2 = arith.constant 0 : index
    %1 = vector.load %arg3[%c0_1, %c0_2] : memref<16x64xf32, #tpu.memory_space<vmem>>, vector<16x64xf32>
    %cst = arith.constant dense<0.000000e+00> : vector<8x64xf32>
    %2 = tpu.matmul %0, %1, %cst {dimension_numbers = #tpu.dot_dimension_numbers<[1], [0], [0], [1], [0, 0, 1, 1], [], []>} : vector<8x16xf32>, vector<16x64xf32>, vector<8x64xf32> -> vector<8x64xf32>
    %cst_3 = arith.constant 2.000000e-01 : f32
    %3 = vector.broadcast %cst_3 : f32 to vector<8x64xf32>
    %4 = arith.mulf %2, %3 : vector<8x64xf32>
    %c0_4 = arith.constant 0 : index
    %c0_5 = arith.constant 0 : index
    %5 = vector.load %arg4[%c0_4, %c0_5] : memref<8x64xf32, #tpu.memory_space<vmem>>, vector<8x64xf32>
    tpu.vector_store %arg4[%c0_4, %c0_5], %4 {strides = array<i32>} : memref<8x64xf32, #tpu.memory_space<vmem>>, vector<8x64xf32>,
    return
  }
  func.func @transform_0(%arg0: i32, %arg1: i32) -> (i32, i32) {
    %c0_i32 = arith.constant 0 : i32
    %c0_i32_0 = arith.constant 0 : i32
    return %arg1, %c0_i32 : i32, i32
  }
  func.func @transform_1(%arg0: i32, %arg1: i32) -> (i32, i32) {
    %c0_i32 = arith.constant 0 : i32
    %c0_i32_0 = arith.constant 0 : i32
    return %c0_i32, %arg0 : i32, i32
  }
  func.func @transform_2(%arg0: i32, %arg1: i32) -> (i32, i32) {
    %c0_i32 = arith.constant 0 : i32
    return %arg1, %arg0 : i32, i32
  }
}

</mosaic_0001>

<llo_original>
// kernel: moving_avg.1
$region0: #{moving_avg.1}
  #allocation0 [shape = 'u32[]', space=smem, size = 0x4, offset = 0x4, fixed_abs, tag = 'smem constant byte address 0x4 - core index']
  #allocation1 [shape = 'u32[144,128]{1,0:T(1,128)}', space=vmem, size = 0x12000, scoped, tag = 'internal scratch']
  %s0 = inlined_call_operand.vmem [shape: f32[16,16], index: 0, kind: input, shape index: {}]
  %s1 = inlined_call_operand.vmem [shape: f32[16,64], index: 1, kind: input, shape index: {}]
  %s2 = inlined_call_operand.vmem [shape: f32[16,64], index: 2, kind: output, shape index: {}]
  %s3 = sld [smem:[#allocation0]]
  $region41: #{moving_avg.1} parent=0
    _
  %s5 = ssub.s32 1, %s3
  %s6 = scalar_select 0, %s5, %s3
  loop: start=0, step=1, limit=4
  $region2: #{moving_avg.1} parent=0 // loop_pre_header
    _
  $region3: #{moving_avg.1} parent=0 // loop_header
    %s8 = sphi 0, %s12
    %p9 = scmp.ge.s32.totalorder %s8, 4
    %s15 = sphi 0, %s27
    %s16 = sphi 0, %s23
    %s17 = sphi 0, %s15
    %s18 = sphi 0, %s16
    %s19 = sphi 0, %s17
    %s20 = sphi 0, %s18
    %s30 = sphi 0, %s32
    %s33 = sphi 0, %s30
    %s34 = sphi 0, %s33
    %s50 = sphi 0, %s34
    %s56 = sphi 0, %s58
    %s59 = sphi 0, %s56
    %s60 = sphi 0, %s59
    %s76 = sphi 0, %s60
    %s84 = sphi 0, %s86
    %s87 = sphi 0, %s84
    %s88 = sphi 0, %s87
    %s104 = sphi 0, %s88
  $region4: #{moving_avg.1} parent=0 // loop_header_branch
    %11 = sbr.rel (%p9) target = $region8
  $region5: #{moving_avg.1} parent=0 // loop_body
    %s13 = ssub.s32 %s8, 1
    %s14 = ssub.s32 %s8, 2
    %s21 = sadd.s32 1, %s16
    %p22 = scmp.ge.s32.totalorder %s21, 2
    %s23 = scalar_select %p22, 0, %s21
    %s24 = sadd.s32 1, %s15
    %s25 = scalar_select %p22, %s24, %s15
    %p26 = scmp.ge.s32.totalorder %s25, 1
    %s27 = scalar_select %p26, 0, %s25
    %s28 = ssub.s32 %s16, %s23
    %p29 = scmp.eq.s32.totalorder %s28, 0
    %s31 = sadd.s32 %s30, 1
    %s32 = scalar_select %p29, %s30, %s31
    %p35 = pneg %p29
    %p36 = scmp.eq.s32.totalorder %s8, 1
    %p37 = por %p35, %p36
    %p38 = scmp.ne.s32.totalorder %s30, %s33
    %p39 = scmp.eq.s32.totalorder %s8, 0
    %p40 = por %p38, %p39
    %p41 = scmp.ne.s32.totalorder %s30, %s33
    %p42 = scmp.eq.s32.totalorder %s13, 1
    %p43 = por %p41, %p42
    %p44 = scmp.ne.s32.totalorder %s33, %s34
    %p45 = scmp.eq.s32.totalorder %s13, 0
    %p46 = por %p44, %p45
    %p47 = scmp.ne.s32.totalorder %s33, %s34
    %p48 = scmp.eq.s32.totalorder %s14, 1
    %p49 = por %p47, %p48
    %p51 = scmp.ne.s32.totalorder %s34, %s50
    %p52 = scmp.eq.s32.totalorder %s14, 0
    %p53 = por %p51, %p52
    %s54 = ssub.s32 %s15, %s27
    %p55 = scmp.eq.s32.totalorder %s54, 0
    %s57 = sadd.s32 %s56, 1
    %s58 = scalar_select %p55, %s56, %s57
    %p61 = pneg %p55
    %p62 = scmp.eq.s32.totalorder %s8, 1
    %p63 = por %p61, %p62
    %p64 = scmp.ne.s32.totalorder %s56, %s59
    %p65 = scmp.eq.s32.totalorder %s8, 0
    %p66 = por %p64, %p65
    %p67 = scmp.ne.s32.totalorder %s56, %s59
    %p68 = scmp.eq.s32.totalorder %s13, 1
    %p69 = por %p67, %p68
    %p70 = scmp.ne.s32.totalorder %s59, %s60
    %p71 = scmp.eq.s32.totalorder %s13, 0
    %p72 = por %p70, %p71
    %p73 = scmp.ne.s32.totalorder %s59, %s60
    %p74 = scmp.eq.s32.totalorder %s14, 1
    %p75 = por %p73, %p74
    %p77 = scmp.ne.s32.totalorder %s60, %s76
    %p78 = scmp.eq.s32.totalorder %s14, 0
    %p79 = por %p77, %p78
    %s80 = ssub.s32 %s16, %s23
    %s81 = ssub.s32 %s15, %s27
    %s82 = sor.u32 %s80, %s81
    %p83 = scmp.eq.s32.totalorder %s82, 0
    %s85 = sadd.s32 %s84, 1
    %s86 = scalar_select %p83, %s84, %s85
    %p89 = pneg %p83
    %p90 = scmp.eq.s32.totalorder %s8, 1
    %p91 = por %p89, %p90
    %p92 = scmp.ne.s32.totalorder %s84, %s87
    %p93 = scmp.eq.s32.totalorder %s8, 0
    %p94 = por %p92, %p93
    %p95 = scmp.ne.s32.totalorder %s84, %s87
    %p96 = scmp.eq.s32.totalorder %s13, 1
    %p97 = por %p95, %p96
    %p98 = scmp.ne.s32.totalorder %s87, %s88
    %p99 = scmp.eq.s32.totalorder %s13, 0
    %p100 = por %p98, %p99
    %p101 = scmp.ne.s32.totalorder %s87, %s88
    %p102 = scmp.eq.s32.totalorder %s14, 1
    %p103 = por %p101, %p102
    %p105 = scmp.ne.s32.totalorder %s88, %s104
    %p106 = scmp.eq.s32.totalorder %s14, 0
    %p107 = por %p105, %p106
    %p108 = scmp.le.s32.totalorder 1, %s8
    %p109 = scmp.lt.s32.totalorder %s8, 3
    %p110 = pnand %p108, %p109
    %p111 = pneg %p110
    // Predicated region
    $region9: #{moving_avg.1} parent=5 // pred_check
      _
    $region10: #{moving_avg.1} parent=5 // pred_check_branch
      %113 = sbr.rel (%p110) target = $region12
    $region11: #{moving_avg.1} parent=5 // pred_region
      %s114 = ssub.s32 %s8, 1
      // Predicated region
      $region13: #{moving_avg.1} parent=11 // pred_check
        %p115 = pneg %p72
      $region14: #{moving_avg.1} parent=11 // pred_check_branch
        %117 = sbr.rel (%p115) target = $region16
      $region15: #{moving_avg.1} parent=11 // pred_region
        %p118 = scmp.lt.s32.totalorder %s17, 0
        %s119 = scalar_select %p118, %s17, 0
        %s120 = smul.addr %s119, 8
        %s121 = scalar_lea.vmem %s1, %s120
      $region16: #{moving_avg.1} parent=11 // pred_fallthru
        _
    $region12: #{moving_avg.1} parent=5 // pred_fallthru
      _
    %p122 = scmp.lt.s32.totalorder %s8, 2
    // Predicated region
    $region17: #{moving_avg.1} parent=5 // pred_check
      %p123 = pneg %p122
    $region18: #{moving_avg.1} parent=5 // pred_check_branch
      %125 = sbr.rel (%p123) target = $region20
    $region19: #{moving_avg.1} parent=5 // pred_region
      // Predicated region
      $region21: #{moving_avg.1} parent=19 // pred_check
        %p126 = pneg %p40
      $region22: #{moving_avg.1} parent=19 // pred_check_branch
        %128 = sbr.rel (%p126) target = $region24
      $region23: #{moving_avg.1} parent=19 // pred_region
        %p129 = scmp.lt.s32.totalorder %s16, 1
        %s130 = scalar_select %p129, %s16, 1
        %s131 = smul.addr %s130, 8
        %s132 = scalar_lea.vmem %s0, %s131
      $region24: #{moving_avg.1} parent=19 // pred_fallthru
        _
    $region20: #{moving_avg.1} parent=5 // pred_fallthru
      _
    %p133 = scmp.le.s32.totalorder 1, %s8
    %p134 = scmp.lt.s32.totalorder %s8, 3
    %p135 = pnand %p133, %p134
    %p136 = pneg %p135
    // Predicated region
    $region25: #{moving_avg.1} parent=5 // pred_check
      _
    $region26: #{moving_avg.1} parent=5 // pred_check_branch
      %138 = sbr.rel (%p135) target = $region28
    $region27: #{moving_avg.1} parent=5 // pred_region
      %s139 = ssub.s32 %s8, 1
      %p140 = scmp.lt.s32.totalorder %s18, 1
      %s141 = scalar_select %p140, %s18, 1
      %s142 = smul.addr %s141, 8
      %s143 = scalar_lea.vmem %s0, %s142
      %p144 = pneg %p46
      %p145 = pneg %p43
      %p146 = scmp.lt.s32.totalorder %s17, 0
      %s147 = scalar_select %p146, %s17, 0
      %s148 = smul.addr %s147, 8
      %s149 = scalar_lea.vmem %s1, %s148
      %p150 = pneg %p72
      %p151 = pneg %p69
      %p152 = pneg %p100
      %p153 = pneg %p97
      %p154 = scmp.lt.s32.totalorder %s18, 1
      %s155 = scalar_select %p154, %s18, 1
      %p156 = scmp.lt.s32.totalorder %s17, 0
      %s157 = scalar_select %p156, %s17, 0
      %s158 = sadd.s32 %s157, %s155
      %s159 = smul.addr %s158, 8
      %s160 = scalar_lea.vmem %s2, %s159
      %p161 = scmp.lt.s32.totalorder %s18, 1
      %s162 = scalar_select %p161, %s18, 1
      %s163 = smul.addr %s162, 8
      %s164 = scalar_lea.vmem %s0, %s163
      %p165 = scmp.lt.s32.totalorder %s17, 0
      %s166 = scalar_select %p165, %s17, 0
      %s167 = smul.addr %s166, 8
      %s168 = scalar_lea.vmem %s1, %s167
      %p169 = scmp.lt.s32.totalorder %s18, 1
      %s170 = scalar_select %p169, %s18, 1
      %p171 = scmp.lt.s32.totalorder %s17, 0
      %s172 = scalar_select %p171, %s17, 0
      %s173 = sadd.s32 %s172, %s170
      %s174 = smul.addr %s173, 8
      %s175 = scalar_lea.vmem %s2, %s174
      %v176 = vld [vmem:[%s164] sm:$0xff]
      %v177 = vld [vmem:[%s168] sm:$0xff]
      %v178 = vld [vmem:[%s168 + $0x8] sm:$0xff]
      %vm179 = vcmask 130048
      %v181 = vsel %vm179, %v176, 0
      %183 = vmatprep.subr.mxu0 0.0
      %184 = vmatpush1.msra.mxu0 %v177
      %185 = vmatprep.subr.mxu0 0.0
      %186 = vmatpush1.msra.mxu0 %v178
      %187 = vmatprep.subr.mxu0 0.0
      %188 = vmatpush1.msra.mxu0 0.0
      %189 = vmatprep.subr.mxu0 0.0
      %190 = vmatpush1.msra.mxu0 0.0
      %191 = vmatprep.subr.mxu0 0.0
      %192 = vmatpush1.msra.mxu0 0.0
      %193 = vmatprep.subr.mxu0 0.0
      %194 = vmatpush1.msra.mxu0 0.0
      %195 = vmatprep.subr.mxu0 0.0
      %196 = vmatpush1.msra.mxu0 0.0
      %197 = vmatprep.subr.mxu0 0.0
      %198 = vmatpush1.msra.mxu0 0.0
      %199 = vmatprep.subr.mxu0 0.0
      %200 = vmatpush1.msra.mxu0 0.0
      %201 = vmatprep.subr.mxu0 0.0
      %202 = vmatpush1.msra.mxu0 0.0
      %203 = vmatprep.subr.mxu0 0.0
      %204 = vmatpush1.msra.mxu0 0.0
      %205 = vmatprep.subr.mxu0 0.0
      %206 = vmatpush1.msra.mxu0 0.0
      %207 = vmatprep.subr.mxu0 0.0
      %208 = vmatpush1.msra.mxu0 0.0
      %209 = vmatprep.subr.mxu0 0.0
      %210 = vmatpush1.msra.mxu0 0.0
      %211 = vmatprep.subr.mxu0 0.0
      %212 = vmatpush1.msra.mxu0 0.0
      %213 = vmatprep.subr.mxu0 0.0
      %214 = vmatpush1.msra.mxu0 0.0
      %215 = vmatprep.subr.mxu0 0.0
      %216 = vmatpush1.msra.mxu0 0.0
      %217 = vmatprep.subr.mxu0 0.0
      %218 = vmatpush1.msra.mxu0 0.0
      %219 = vmatprep.subr.mxu0 0.0
      %220 = vmatpush1.msra.mxu0 0.0
      %221 = vmatprep.subr.mxu0 0.0
      %222 = vmatpush1.msra.mxu0 0.0
      %223 = vmatprep.subr.mxu0 0.0
      %224 = vmatpush1.msra.mxu0 0.0
      %225 = vmatprep.subr.mxu0 0.0
      %226 = vmatpush1.msra.mxu0 0.0
      %227 = vmatprep.subr.mxu0 0.0
      %228 = vmatpush1.msra.mxu0 0.0
      %229 = vmatprep.subr.mxu0 0.0
      %230 = vmatpush1.msra.mxu0 0.0
      %231 = vmatprep.subr.mxu0 0.0
      %232 = vmatpush1.msra.mxu0 0.0
      %233 = vmatprep.subr.mxu0 0.0
      %234 = vmatpush1.msra.mxu0 0.0
      %235 = vmatprep.subr.mxu0 0.0
      %236 = vmatpush1.msra.mxu0 0.0
      %237 = vmatprep.subr.mxu0 0.0
      %238 = vmatpush1.msra.mxu0 0.0
      %239 = vmatprep.subr.mxu0 0.0
      %240 = vmatpush1.msra.mxu0 0.0
      %241 = vmatprep.subr.mxu0 0.0
      %242 = vmatpush1.msra.mxu0 0.0
      %243 = vmatprep.subr.mxu0 0.0
      %244 = vmatpush1.msra.mxu0 0.0
      %245 = vmatprep.subr.mxu0 0.0
      %246 = vmatpush1.msra.mxu0 0.0
      %247 = vmatprep.mubr.f32.mxu0 0.0
      %248 = vmatmul.mubr.f32.gmra.mrb[0].mxu0 %v181
      %v249 = vpop.f32.mrb[0].mxu0
      %v250 = vadd.f32 0.0, %v249
      %v251 = vpop.f32.mrb[0].mxu0
      %252 = vdwg.mxu0
      %v253 = vmul.f32 %v250, 0.2
      %vm254 = vcmask 523264
      %255 = vst.msk [vmem:[%s175] sm:$0xff] %vm254, %v253
      %p256 = scmp.lt.s32.totalorder %s18, 1
      %s257 = scalar_select %p256, %s18, 1
      %p258 = scmp.lt.s32.totalorder %s17, 0
      %s259 = scalar_select %p258, %s17, 0
      %s260 = sadd.s32 %s259, %s257
      %s261 = smul.addr %s260, 8
      %s262 = scalar_lea.vmem %s2, %s261
      // Predicated region
      $region29: #{moving_avg.1} parent=27 // pred_check
        %p263 = pneg %p97
      $region30: #{moving_avg.1} parent=27 // pred_check_branch
        %265 = sbr.rel (%p263) target = $region32
      $region31: #{moving_avg.1} parent=27 // pred_region
        _
      $region32: #{moving_avg.1} parent=27 // pred_fallthru
        _
    $region28: #{moving_avg.1} parent=5 // pred_fallthru
      _
    %p266 = scmp.le.s32.totalorder 2, %s8
    // Predicated region
    $region33: #{moving_avg.1} parent=5 // pred_check
      %p267 = pneg %p266
    $region34: #{moving_avg.1} parent=5 // pred_check_branch
      %269 = sbr.rel (%p267) target = $region36
    $region35: #{moving_avg.1} parent=5 // pred_region
      %s270 = ssub.s32 %s8, 2
      // Predicated region
      $region37: #{moving_avg.1} parent=35 // pred_check
        %p271 = pneg %p103
      $region38: #{moving_avg.1} parent=35 // pred_check_branch
        %273 = sbr.rel (%p271) target = $region40
      $region39: #{moving_avg.1} parent=35 // pred_region
        %p274 = scmp.lt.s32.totalorder %s20, 1
        %s275 = scalar_select %p274, %s20, 1
        %p276 = scmp.lt.s32.totalorder %s19, 0
        %s277 = scalar_select %p276, %s19, 0
        %s278 = sadd.s32 %s277, %s275
        %s279 = smul.addr %s278, 8
        %s280 = scalar_lea.vmem %s2, %s279
      $region40: #{moving_avg.1} parent=35 // pred_fallthru
        _
    $region36: #{moving_avg.1} parent=5 // pred_fallthru
      _
  $region6: #{moving_avg.1} parent=0 // loop_footer
    %s12 = sadd.s32 1, %s8
  $region7: #{moving_avg.1} parent=0 // loop_footer_branch
    %7 = sbr.rel target = $region3
  $region8: #{moving_avg.1} parent=0 // loop_exit
    _

</llo_original>
